<compile_context>
chip_gen: v5e
topology: v5e:2x2
jax: 0.10.0
libtpu: 0.0.40
codegen_flags: <defaults>
</compile_context>

<pallas_src>
import functools

import jax
import jax.numpy as jnp
from jax.experimental import pallas as pl
from jax.experimental.pallas import tpu as pltpu


def _round_up(x: int, m: int) -> int:
    return (x + m - 1) // m * m


def critic_kernel(state_ref, action_ref,
                  w1s_ref, w1a_ref, b1_ref,
                  w2_ref, b2_ref,
                  w3_ref, b3_ref,
                  o_ref, *, out_is_scalar: bool):
    # state_ref:  [TILE_B, state_dim]   action_ref: [TILE_B, action_dim]
    # w1s_ref:    [state_dim, hid]      w1a_ref:    [action_dim, hid]
    # w2_ref:     [hid, hid]
    # w3_ref:     [1, hid] (out_dim==1, transposed) or [hid, out_dim]
    # b*_ref:     [1, ...]              o_ref:      [TILE_B, out_dim]

    # Layer 1 with the concat fused as a split matmul (MXU, f32 accumulation).
    h1 = jnp.dot(state_ref[...], w1s_ref[...], preferred_element_type=jnp.float32)
    h1 = h1 + jnp.dot(action_ref[...], w1a_ref[...], preferred_element_type=jnp.float32)
    h1 = jnp.maximum(h1 + b1_ref[...], 0.0)

    # Layer 2.
    h2 = jnp.dot(h1, w2_ref[...], preferred_element_type=jnp.float32) + b2_ref[...]
    h2 = jnp.maximum(h2, 0.0)

    # Layer 3.
    if out_is_scalar:
        # N=1 matmul wastes the MXU; the VPU multiply + lane reduce runs in
        # otherwise-idle slots and pairs with the narrow (tile_b, 1) store.
        out = jnp.sum(h2 * w3_ref[...], axis=-1, keepdims=True) + b3_ref[...]
    else:
        out = jnp.dot(h2, w3_ref[...], preferred_element_type=jnp.float32) + b3_ref[...]

    o_ref[...] = out.astype(o_ref.dtype)


def critic_forward(state, action, params, *, max_tile_b=1024):
    """state: [B, state_dim], action: [B, action_dim] -> [B, output_size]."""
    w1, b1, w2, b2, w3, b3 = params

    B, state_dim = state.shape
    _, action_dim = action.shape
    in_dim = state_dim + action_dim
    hid = w1.shape[1]
    out_dim = w3.shape[1]
    f32b = 4

    # ---- Batch tiling -------------------------------------------------------
    # One big tile when it fits (single-TC chips: grid steps are a serial loop,
    # ~0.35us each).  Otherwise an even number of tiles so v7x's two
    # TensorCores get identical work, with minimal row padding.
    if B <= max_tile_b:
        n_tiles = 1
    else:
        n_tiles = -(-B // max_tile_b)
        if n_tiles % 2:
            n_tiles += 1
    tile_b = _round_up(-(-B // n_tiles), 8)
    b_pad = n_tiles * tile_b
    grid = (n_tiles,)

    if b_pad != B:
        state = jnp.pad(state, ((0, b_pad - B), (0, 0)))
        action = jnp.pad(action, ((0, b_pad - B), (0, 0)))

    # ---- Fuse the concat: split W1 into the state/action row blocks. --------
    w1s = w1[:state_dim]
    w1a = w1[state_dim:]

    # out_dim == 1: pass W3 transposed as (1, hid) for the VPU path.
    out_is_scalar = (out_dim == 1)
    w3_k = w3.T if out_is_scalar else w3

    # ---- BlockSpecs ----------------------------------------------------------
    def batch_spec(shape):
        return pl.BlockSpec(shape, lambda i: (i, 0))

    # Resident (constant index_map) blocks never re-DMA after the first grid
    # step; single-buffer them once the dead second buffer costs real VMEM
    # (only matters at large hidden sizes, so the small-hid path is untouched).
    single_buffer_weights = (hid * hid * f32b) >= (2 << 20)

    def resident_spec(shape):
        if single_buffer_weights:
            return pl.BlockSpec(shape, lambda i: (0, 0),
                                pipeline_mode=pl.Buffered(1))
        return pl.BlockSpec(shape, lambda i: (0, 0))

    # ---- VMEM budget: actual need + headroom, capped below v7x physical. ----
    wt_buffers = 1 if single_buffer_weights else 2
    io_bytes = (2 * tile_b * (state_dim + action_dim) * f32b   # dbl-buffered inputs
                + 2 * tile_b * out_dim * f32b)                 # dbl-buffered output
    wt_bytes = wt_buffers * (state_dim * hid + action_dim * hid + hid * hid
                             + hid * out_dim + 2 * hid + out_dim) * f32b
    act_bytes = 3 * tile_b * hid * f32b + tile_b * out_dim * f32b
    vmem_limit = min(io_bytes + wt_bytes + act_bytes + (8 << 20), 48 << 20)

    # ---- Cost estimate (true output width, true padding). -------------------
    flops = 2 * b_pad * (in_dim * hid + hid * hid + hid * out_dim)
    bytes_accessed = (
        b_pad * in_dim * f32b
        + (in_dim * hid + hid * hid + hid * out_dim + 2 * hid + out_dim) * f32b
        + b_pad * out_dim * f32b
    )

    out = pl.pallas_call(
        functools.partial(critic_kernel, out_is_scalar=out_is_scalar),
        out_shape=jax.ShapeDtypeStruct((b_pad, out_dim), jnp.float32),
        grid=grid,
        in_specs=[
            batch_spec((tile_b, state_dim)),
            batch_spec((tile_b, action_dim)),
            resident_spec((state_dim, hid)),
            resident_spec((action_dim, hid)),
            resident_spec((1, hid)),
            resident_spec((hid, hid)),
            resident_spec((1, hid)),
            resident_spec(tuple(w3_k.shape)),
            resident_spec((1, out_dim)),
        ],
        out_specs=batch_spec((tile_b, out_dim)),
        compiler_params=pltpu.CompilerParams(
            dimension_semantics=("parallel",),   # shards batch tiles across v7x's 2 TCs
            vmem_limit_bytes=int(vmem_limit),
        ),
        cost_estimate=pl.CostEstimate(
            flops=flops, transcendentals=0, bytes_accessed=bytes_accessed
        ),
    )(state, action, w1s, w1a, b1, w2, b2, w3_k, b3)

    return out[:B]


def init_params(key, input_size, hidden_size, output_size):
    """Deterministic PyTorch-style uniform(-1/sqrt(fan_in), 1/sqrt(fan_in)) init.

    Weights are stored as (in_features, out_features) -- i.e. transposed
    relative to nn.Linear.weight -- so the kernel can do x @ W directly.
    """
    ks = jax.random.split(key, 6)

    def lin(kw, kb, fan_in, fan_out):
        bound = 1.0 / jnp.sqrt(jnp.float32(fan_in))
        w = jax.random.uniform(kw, (fan_in, fan_out), jnp.float32, -bound, bound)
        b = jax.random.uniform(kb, (1, fan_out), jnp.float32, -bound, bound)
        return w, b

    w1, b1 = lin(ks[0], ks[1], input_size, hidden_size)
    w2, b2 = lin(ks[2], ks[3], hidden_size, hidden_size)
    w3, b3 = lin(ks[4], ks[5], hidden_size, output_size)
    return (w1, b1, w2, b2, w3, b3)


if __name__ == "__main__":
    key = jax.random.PRNGKey(0)
    k_state, k_action, k_params = jax.random.split(key, 3)

    batch = 2
    state_dim, action_dim = 24, 8          # input_size = 32
    input_size = state_dim + action_dim
    hidden_size = 32
    output_size = 1

    state = jax.random.normal(k_state, (batch, state_dim), jnp.float32)
    action = jax.random.normal(k_action, (batch, action_dim), jnp.float32)
    params = init_params(k_params, input_size, hidden_size, output_size)

    out = jax.block_until_ready(critic_forward(state, action, params))

    # Pure-JAX reference (highest matmul precision so it tracks the f32 MXU path).
    w1, b1, w2, b2, w3, b3 = params
    HI = jax.lax.Precision.HIGHEST

    def ref_fwd(s, a):
        x = jnp.concatenate([s, a], axis=1)
        h = jnp.maximum(jnp.dot(x, w1, precision=HI) + b1, 0.0)
        h = jnp.maximum(jnp.dot(h, w2, precision=HI) + b2, 0.0)
        return jnp.dot(h, w3, precision=HI) + b3

    ref = ref_fwd(state, action)
    assert out.shape == (batch, output_size)
    assert jnp.allclose(out, ref, atol=1e-3, rtol=1e-3)

    # Larger, multi-tile batch to exercise the grid path
    # (B=1030 -> 2 even tiles of 520 rows, b_pad=1040).
    big_b = 1030
    kb1, kb2 = jax.random.split(jax.random.PRNGKey(1))
    big_state = jax.random.normal(kb1, (big_b, state_dim), jnp.float32)
    big_action = jax.random.normal(kb2, (big_b, action_dim), jnp.float32)
    big_out = jax.block_until_ready(critic_forward(big_state, big_action, params))
    assert big_out.shape == (big_b, output_size)
    assert jnp.allclose(big_out, ref_fwd(big_state, big_action), atol=1e-3, rtol=1e-3)

    print("KERNEL_OK")
</pallas_src>

<mosaic_0001>
module attributes {stable_mosaic.version = 11 : i64} {
  func.func @critic_kernel(%arg0: i32, %arg1: memref<8x24xf32, #tpu.memory_space<vmem>>, %arg2: memref<8x8xf32, #tpu.memory_space<vmem>>, %arg3: memref<24x32xf32, #tpu.memory_space<vmem>>, %arg4: memref<8x32xf32, #tpu.memory_space<vmem>>, %arg5: memref<1x32xf32, #tpu.memory_space<vmem>>, %arg6: memref<32x32xf32, #tpu.memory_space<vmem>>, %arg7: memref<1x32xf32, #tpu.memory_space<vmem>>, %arg8: memref<1x32xf32, #tpu.memory_space<vmem>>, %arg9: memref<1x1xf32, #tpu.memory_space<vmem>>, %arg10: memref<8x1xf32, #tpu.memory_space<vmem>>) attributes {dimension_semantics = [#tpu.dimension_semantics<parallel>], iteration_bounds = array<i64: 1>, scalar_prefetch = 0 : i64, scratch_operands = 0 : i64, tpu.core_type = #tpu.core_type<tc>, window_params = [{transform_indices = @transform_0, window_bounds = array<i64: 8, 24>}, {transform_indices = @transform_1, window_bounds = array<i64: 8, 8>}, {pipeline_mode = #tpu.pipeline_mode<synchronous>, transform_indices = @transform_2, window_bounds = array<i64: 24, 32>}, {pipeline_mode = #tpu.pipeline_mode<synchronous>, transform_indices = @transform_3, window_bounds = array<i64: 8, 32>}, {pipeline_mode = #tpu.pipeline_mode<synchronous>, transform_indices = @transform_4, window_bounds = array<i64: 1, 32>}, {pipeline_mode = #tpu.pipeline_mode<synchronous>, transform_indices = @transform_5, window_bounds = array<i64: 32, 32>}, {pipeline_mode = #tpu.pipeline_mode<synchronous>, transform_indices = @transform_6, window_bounds = array<i64: 1, 32>}, {pipeline_mode = #tpu.pipeline_mode<synchronous>, transform_indices = @transform_7, window_bounds = array<i64: 1, 32>}, {pipeline_mode = #tpu.pipeline_mode<synchronous>, transform_indices = @transform_8, window_bounds = array<i64: 1, 1>}, {transform_indices = @transform_9, window_bounds = array<i64: 8, 1>}]} {
    %c0 = arith.constant 0 : index
    %c0_0 = arith.constant 0 : index
    %0 = vector.load %arg1[%c0, %c0_0] : memref<8x24xf32, #tpu.memory_space<vmem>>, vector<8x24xf32>
    %c0_1 = arith.constant 0 : index
    %c0_2 = arith.constant 0 : index
    %1 = vector.load %arg3[%c0_1, %c0_2] : memref<24x32xf32, #tpu.memory_space<vmem>>, vector<24x32xf32>
    %cst = arith.constant dense<0.000000e+00> : vector<8x32xf32>
    %2 = tpu.matmul %0, %1, %cst {dimension_numbers = #tpu.dot_dimension_numbers<[1], [0], [0], [1], [0, 0, 1, 1], [], []>} : vector<8x24xf32>, vector<24x32xf32>, vector<8x32xf32> -> vector<8x32xf32>
    %c0_3 = arith.constant 0 : index
    %c0_4 = arith.constant 0 : index
    %3 = vector.load %arg2[%c0_3, %c0_4] : memref<8x8xf32, #tpu.memory_space<vmem>>, vector<8x8xf32>
    %c0_5 = arith.constant 0 : index
    %c0_6 = arith.constant 0 : index
    %4 = vector.load %arg4[%c0_5, %c0_6] : memref<8x32xf32, #tpu.memory_space<vmem>>, vector<8x32xf32>
    %cst_7 = arith.constant dense<0.000000e+00> : vector<8x32xf32>
    %5 = tpu.matmul %3, %4, %cst_7 {dimension_numbers = #tpu.dot_dimension_numbers<[1], [0], [0], [1], [0, 0, 1, 1], [], []>} : vector<8x8xf32>, vector<8x32xf32>, vector<8x32xf32> -> vector<8x32xf32>
    %6 = arith.addf %2, %5 : vector<8x32xf32>
    %c0_8 = arith.constant 0 : index
    %c0_9 = arith.constant 0 : index
    %7 = vector.load %arg5[%c0_8, %c0_9] : memref<1x32xf32, #tpu.memory_space<vmem>>, vector<1x32xf32>
    %8 = vector.broadcast %7 : vector<1x32xf32> to vector<8x32xf32>
    %9 = arith.addf %6, %8 : vector<8x32xf32>
    %cst_10 = arith.constant 0.000000e+00 : f32
    %10 = vector.broadcast %cst_10 : f32 to vector<8x32xf32>
    %11 = arith.maximumf %9, %10 : vector<8x32xf32>
    %c0_11 = arith.constant 0 : index
    %c0_12 = arith.constant 0 : index
    %12 = vector.load %arg6[%c0_11, %c0_12] : memref<32x32xf32, #tpu.memory_space<vmem>>, vector<32x32xf32>
    %cst_13 = arith.constant dense<0.000000e+00> : vector<8x32xf32>
    %13 = tpu.matmul %11, %12, %cst_13 {dimension_numbers = #tpu.dot_dimension_numbers<[1], [0], [0], [1], [0, 0, 1, 1], [], []>} : vector<8x32xf32>, vector<32x32xf32>, vector<8x32xf32> -> vector<8x32xf32>
    %c0_14 = arith.constant 0 : index
    %c0_15 = arith.constant 0 : index
    %14 = vector.load %arg7[%c0_14, %c0_15] : memref<1x32xf32, #tpu.memory_space<vmem>>, vector<1x32xf32>
    %15 = vector.broadcast %14 : vector<1x32xf32> to vector<8x32xf32>
    %16 = arith.addf %13, %15 : vector<8x32xf32>
    %cst_16 = arith.constant 0.000000e+00 : f32
    %17 = vector.broadcast %cst_16 : f32 to vector<8x32xf32>
    %18 = arith.maximumf %16, %17 : vector<8x32xf32>
    %c0_17 = arith.constant 0 : index
    %c0_18 = arith.constant 0 : index
    %19 = vector.load %arg8[%c0_17, %c0_18] : memref<1x32xf32, #tpu.memory_space<vmem>>, vector<1x32xf32>
    %20 = vector.broadcast %19 : vector<1x32xf32> to vector<8x32xf32>
    %21 = arith.mulf %18, %20 : vector<8x32xf32>
    %cst_19 = arith.constant dense<0.000000e+00> : vector<8xf32>
    %22 = vector.multi_reduction <add>, %21, %cst_19 [1] : vector<8x32xf32> to vector<8xf32>
    %23 = vector.shape_cast %22 : vector<8xf32> to vector<8x1xf32>
    %c0_20 = arith.constant 0 : index
    %c0_21 = arith.constant 0 : index
    %24 = vector.load %arg9[%c0_20, %c0_21] : memref<1x1xf32, #tpu.memory_space<vmem>>, vector<1x1xf32>
    %25 = vector.broadcast %24 : vector<1x1xf32> to vector<8x1xf32>
    %26 = arith.addf %23, %25 : vector<8x1xf32>
    %c0_22 = arith.constant 0 : index
    %c0_23 = arith.constant 0 : index
    %27 = vector.load %arg10[%c0_22, %c0_23] : memref<8x1xf32, #tpu.memory_space<vmem>>, vector<8x1xf32>
    tpu.vector_store %arg10[%c0_22, %c0_23], %26 {strides = array<i32>} : memref<8x1xf32, #tpu.memory_space<vmem>>, vector<8x1xf32>,
    return
  }
  func.func @transform_0(%arg0: i32) -> (i32, i32) {
    %c0_i32 = arith.constant 0 : i32
    %c0_i32_0 = arith.constant 0 : i32
    return %arg0, %c0_i32 : i32, i32
  }
  func.func @transform_1(%arg0: i32) -> (i32, i32) {
    %c0_i32 = arith.constant 0 : i32
    %c0_i32_0 = arith.constant 0 : i32
    return %arg0, %c0_i32 : i32, i32
  }
  func.func @transform_2(%arg0: i32) -> (i32, i32) {
    %c0_i32 = arith.constant 0 : i32
    %c0_i32_0 = arith.constant 0 : i32
    %c0_i32_1 = arith.constant 0 : i32
    return %c0_i32, %c0_i32_0 : i32, i32
  }
  func.func @transform_3(%arg0: i32) -> (i32, i32) {
    %c0_i32 = arith.constant 0 : i32
    %c0_i32_0 = arith.constant 0 : i32
    %c0_i32_1 = arith.constant 0 : i32
    return %c0_i32, %c0_i32_0 : i32, i32
  }
  func.func @transform_4(%arg0: i32) -> (i32, i32) {
    %c0_i32 = arith.constant 0 : i32
    %c0_i32_0 = arith.constant 0 : i32
    %c0_i32_1 = arith.constant 0 : i32
    return %c0_i32, %c0_i32_0 : i32, i32
  }
  func.func @transform_5(%arg0: i32) -> (i32, i32) {
    %c0_i32 = arith.constant 0 : i32
    %c0_i32_0 = arith.constant 0 : i32
    %c0_i32_1 = arith.constant 0 : i32
    return %c0_i32, %c0_i32_0 : i32, i32
  }
  func.func @transform_6(%arg0: i32) -> (i32, i32) {
    %c0_i32 = arith.constant 0 : i32
    %c0_i32_0 = arith.constant 0 : i32
    %c0_i32_1 = arith.constant 0 : i32
    return %c0_i32, %c0_i32_0 : i32, i32
  }
  func.func @transform_7(%arg0: i32) -> (i32, i32) {
    %c0_i32 = arith.constant 0 : i32
    %c0_i32_0 = arith.constant 0 : i32
    %c0_i32_1 = arith.constant 0 : i32
    return %c0_i32, %c0_i32_0 : i32, i32
  }
  func.func @transform_8(%arg0: i32) -> (i32, i32) {
    %c0_i32 = arith.constant 0 : i32
    %c0_i32_0 = arith.constant 0 : i32
    %c0_i32_1 = arith.constant 0 : i32
    return %c0_i32, %c0_i32_0 : i32, i32
  }
  func.func @transform_9(%arg0: i32) -> (i32, i32) {
    %c0_i32 = arith.constant 0 : i32
    %c0_i32_0 = arith.constant 0 : i32
    return %arg0, %c0_i32 : i32, i32
  }
}

</mosaic_0001>

<llo_original>
// kernel: tpu_custom_call.1
$region0: #{tpu_custom_call.1}
  #allocation0 [shape = 'u32[]', space=smem, size = 0x4, offset = 0x4, fixed_abs, tag = 'smem constant byte address 0x4 - core index']
  #allocation1 [shape = 'u32[72,128]{1,0:T(1,128)}', space=vmem, size = 0x9000, scoped, tag = 'internal scratch']
  #allocation2 [shape = 'f32[1,1]{1,0:T(1,128)S(1)}', space=vmem, size = 0x200, scoped, tag = 'scoped memory for tpu_custom_call.1']
  %s0 = inlined_call_operand.hbm [shape: f32[8,24], index: 0, kind: input, shape index: {}]
  %s1 = inlined_call_operand.hbm [shape: f32[8,8], index: 1, kind: input, shape index: {}]
  %s2 = inlined_call_operand.hbm [shape: f32[24,32], index: 2, kind: input, shape index: {}]
  %s3 = inlined_call_operand.hbm [shape: f32[8,32], index: 3, kind: input, shape index: {}]
  %s4 = inlined_call_operand.vmem [shape: f32[1,32], index: 4, kind: input, shape index: {}]
  %s5 = inlined_call_operand.hbm [shape: f32[32,32], index: 5, kind: input, shape index: {}]
  %s6 = inlined_call_operand.vmem [shape: f32[1,32], index: 6, kind: input, shape index: {}]
  %s7 = inlined_call_operand.vmem [shape: f32[1,32], index: 7, kind: input, shape index: {}]
  %s8 = inlined_call_operand.<no memory space> [shape: f32[1,1], index: 8, kind: input, shape index: {}]
  %s9 = inlined_call_operand.vmem [shape: f32[8,1], index: 9, kind: output, shape index: {}]
  %s10 = sld [smem:[#allocation0]]
  $region66: #{tpu_custom_call.1} parent=0
    _
  %s12 = ssub.s32 1, %s10
  %s13 = scalar_select 0, %s12, %s10
  %v14 = vstv %s8
  %15 = vst [vmem:[#allocation2] sm:$0x1] %v14
  $region1: #{tpu_custom_call.1} parent=0
    #allocation3 [shape = 'u8[4096]{0}', space=vmem, size = 0x1000, scoped, tag = 'input window, operand 0, single buffered']
    #allocation4 [shape = 's32[1]{0}', space=sflag, size = 0x4, scoped, tag = 'scoped memory for tpu_custom_call.1']
    #allocation5 [shape = 'u8[4096]{0}', space=vmem, size = 0x1000, scoped, tag = 'input window, operand 1, single buffered']
    #allocation6 [shape = 's32[1]{0}', space=sflag, size = 0x4, scoped, tag = 'scoped memory for tpu_custom_call.1']
    #allocation7 [shape = 'u8[12288]{0}', space=vmem, size = 0x3000, scoped, tag = 'input window, operand 2, single buffered']
    #allocation8 [shape = 'u8[4096]{0}', space=vmem, size = 0x1000, scoped, tag = 'input window, operand 3, single buffered']
    #allocation9 [shape = 's32[1]{0}', space=sflag, size = 0x4, scoped, tag = 'scoped memory for tpu_custom_call.1']
    #allocation10 [shape = 'u8[16384]{0}', space=vmem, size = 0x4000, scoped, tag = 'input window, operand 5, single buffered']
    %16 = vsyncpa [#allocation4], 0
    %17 = vsyncpa [#allocation6], 0
    %18 = vsyncpa [#allocation9], 0
    // Predicated region
    $region2: #{tpu_custom_call.1} parent=1 // pred_check
      _
    $region3: #{tpu_custom_call.1} parent=1 // pred_check_branch
      %20 = sbr.rel (0) target = $region5
    $region4: #{tpu_custom_call.1} parent=1 // pred_region
      %22 = vsyncadd [#allocation4], 0
      %s24 = sshll.u32 %s0, 4
      %s25 = int_to_ptr.hbm [resolvable:$true] %s24
      %s26 = sshll.u32 [#allocation3], 4
      %s27 = int_to_ptr.vmem [resolvable:$true] %s26
      %29 = dma.hbm_to_vmem [thread:$0]  %s25, 128, %s27, [#allocation4]
    $region5: #{tpu_custom_call.1} parent=1 // pred_fallthru
      _
    // Predicated region
    $region6: #{tpu_custom_call.1} parent=1 // pred_check
      _
    $region7: #{tpu_custom_call.1} parent=1 // pred_check_branch
      %31 = sbr.rel (0) target = $region9
    $region8: #{tpu_custom_call.1} parent=1 // pred_region
      %33 = vsyncadd [#allocation6], 0
      %s35 = sshll.u32 %s1, 4
      %s36 = int_to_ptr.hbm [resolvable:$true] %s35
      %s37 = sshll.u32 [#allocation5], 4
      %s38 = int_to_ptr.vmem [resolvable:$true] %s37
      %40 = dma.hbm_to_vmem [thread:$0]  %s36, 128, %s38, [#allocation6]
    $region9: #{tpu_custom_call.1} parent=1 // pred_fallthru
      _
    // Predicated region
    $region10: #{tpu_custom_call.1} parent=1 // pred_check
      _
    $region11: #{tpu_custom_call.1} parent=1 // pred_check_branch
      %42 = sbr.rel (0) target = $region13
    $region12: #{tpu_custom_call.1} parent=1 // pred_region
      %44 = vsyncadd [#allocation6], 0
      %s45 = sshll.u32 %s2, 4
      %s46 = int_to_ptr.hbm [resolvable:$true] %s45
      %s47 = sshll.u32 [#allocation7], 4
      %s48 = int_to_ptr.vmem [resolvable:$true] %s47
      %53 = dma.hbm_to_vmem [thread:$0]  %s46, 384, %s48, [#allocation6], 128, 128, 8
    $region13: #{tpu_custom_call.1} parent=1 // pred_fallthru
      _
    // Predicated region
    $region14: #{tpu_custom_call.1} parent=1 // pred_check
      _
    $region15: #{tpu_custom_call.1} parent=1 // pred_check_branch
      %55 = sbr.rel (0) target = $region17
    $region16: #{tpu_custom_call.1} parent=1 // pred_region
      %57 = vsyncadd [#allocation9], 0
      %s59 = sshll.u32 %s3, 4
      %s60 = int_to_ptr.hbm [resolvable:$true] %s59
      %s61 = sshll.u32 [#allocation8], 4
      %s62 = int_to_ptr.vmem [resolvable:$true] %s61
      %64 = dma.hbm_to_vmem [thread:$0]  %s60, 128, %s62, [#allocation9]
    $region17: #{tpu_custom_call.1} parent=1 // pred_fallthru
      _
    // Predicated region
    $region18: #{tpu_custom_call.1} parent=1 // pred_check
      _
    $region19: #{tpu_custom_call.1} parent=1 // pred_check_branch
      %66 = sbr.rel (0) target = $region21
    $region20: #{tpu_custom_call.1} parent=1 // pred_region
      _
    $region21: #{tpu_custom_call.1} parent=1 // pred_fallthru
      _
    // Predicated region
    $region22: #{tpu_custom_call.1} parent=1 // pred_check
      _
    $region23: #{tpu_custom_call.1} parent=1 // pred_check_branch
      %68 = sbr.rel (0) target = $region25
    $region24: #{tpu_custom_call.1} parent=1 // pred_region
      %70 = vsyncadd [#allocation9], 0
      %s71 = sshll.u32 %s5, 4
      %s72 = int_to_ptr.hbm [resolvable:$true] %s71
      %s73 = sshll.u32 [#allocation10], 4
      %s74 = int_to_ptr.vmem [resolvable:$true] %s73
      %79 = dma.hbm_to_vmem [thread:$0]  %s72, 512, %s74, [#allocation9], 128, 128, 8
    $region25: #{tpu_custom_call.1} parent=1 // pred_fallthru
      _
    // Predicated region
    $region26: #{tpu_custom_call.1} parent=1 // pred_check
      _
    $region27: #{tpu_custom_call.1} parent=1 // pred_check_branch
      %81 = sbr.rel (0) target = $region29
    $region28: #{tpu_custom_call.1} parent=1 // pred_region
      _
    $region29: #{tpu_custom_call.1} parent=1 // pred_fallthru
      _
    // Predicated region
    $region30: #{tpu_custom_call.1} parent=1 // pred_check
      _
    $region31: #{tpu_custom_call.1} parent=1 // pred_check_branch
      %83 = sbr.rel (0) target = $region33
    $region32: #{tpu_custom_call.1} parent=1 // pred_region
      _
    $region33: #{tpu_custom_call.1} parent=1 // pred_fallthru
      _
    // Predicated region
    $region34: #{tpu_custom_call.1} parent=1 // pred_check
      _
    $region35: #{tpu_custom_call.1} parent=1 // pred_check_branch
      %85 = sbr.rel (0) target = $region37
    $region36: #{tpu_custom_call.1} parent=1 // pred_region
      _
    $region37: #{tpu_custom_call.1} parent=1 // pred_fallthru
      _
    // Predicated region
    $region38: #{tpu_custom_call.1} parent=1 // pred_check
      _
    $region39: #{tpu_custom_call.1} parent=1 // pred_check_branch
      %87 = sbr.rel (0) target = $region41
    $region40: #{tpu_custom_call.1} parent=1 // pred_region
      %89 = dma.done [#allocation4], 128
    $region41: #{tpu_custom_call.1} parent=1 // pred_fallthru
      _
    // Predicated region
    $region42: #{tpu_custom_call.1} parent=1 // pred_check
      _
    $region43: #{tpu_custom_call.1} parent=1 // pred_check_branch
      %91 = sbr.rel (0) target = $region45
    $region44: #{tpu_custom_call.1} parent=1 // pred_region
      %93 = dma.done [#allocation6], 128
    $region45: #{tpu_custom_call.1} parent=1 // pred_fallthru
      _
    // Predicated region
    $region46: #{tpu_custom_call.1} parent=1 // pred_check
      _
    $region47: #{tpu_custom_call.1} parent=1 // pred_check_branch
      %95 = sbr.rel (0) target = $region49
    $region48: #{tpu_custom_call.1} parent=1 // pred_region
      %97 = dma.done [#allocation6], 384
    $region49: #{tpu_custom_call.1} parent=1 // pred_fallthru
      _
    // Predicated region
    $region50: #{tpu_custom_call.1} parent=1 // pred_check
      _
    $region51: #{tpu_custom_call.1} parent=1 // pred_check_branch
      %99 = sbr.rel (0) target = $region53
    $region52: #{tpu_custom_call.1} parent=1 // pred_region
      %101 = dma.done [#allocation9], 128
    $region53: #{tpu_custom_call.1} parent=1 // pred_fallthru
      _
    // Predicated region
    $region54: #{tpu_custom_call.1} parent=1 // pred_check
      _
    $region55: #{tpu_custom_call.1} parent=1 // pred_check_branch
      %103 = sbr.rel (0) target = $region57
    $region56: #{tpu_custom_call.1} parent=1 // pred_region
      %105 = dma.done [#allocation9], 512
    $region57: #{tpu_custom_call.1} parent=1 // pred_fallthru
      _
    %v106 = vld [vmem:[#allocation3] sm:$0xff]
    %v107 = vld [vmem:[#allocation7] sm:$0xff]
    %v108 = vld [vmem:[#allocation7 + $0x8] sm:$0xff]
    %v109 = vld [vmem:[#allocation7 + $0x10] sm:$0xff]
    %v110 = vld [vmem:[#allocation5] sm:$0xff]
    %v111 = vld [vmem:[#allocation8] sm:$0xff]
    %vm112 = vcmask 64512
    %v114 = vsel %vm112, %v110, 0
    %116 = vmatpush.msra.mxu0 0.0
    %117 = vmatpush.msra.mxu0 0.0
    %118 = vmatpush.msra.mxu0 0.0
    %119 = vmatpush.msra.mxu0 0.0
    %120 = vmatpush.msra.mxu0 0.0
    %121 = vmatpush.msra.mxu0 0.0
    %122 = vmatpush.msra.mxu0 0.0
    %123 = vmatpush.msra.mxu0 0.0
    %124 = vmatpush.msra.mxu0 0.0
    %125 = vmatpush.msra.mxu0 0.0
    %126 = vmatpush.msra.mxu0 0.0
    %127 = vmatpush.msra.mxu0 0.0
    %128 = vmatpush.msra.mxu0 0.0
    %129 = vmatpush.msra.mxu0 0.0
    %130 = vmatpush.msra.mxu0 0.0
    %131 = vmatpush.msra.mxu0 %v111
    %132 = vmatmul.f32.gmra.mxu0 %v114
    %v133 = vpop.f32.mrf.mxu0
    %v134 = vadd.f32 0.0, %v133
    %135 = vdwg.mxu0
    %vm136 = vcmask 195584
    %v138 = vsel %vm136, %v106, 0
    %140 = vmatpush.msra.mxu0 0.0
    %141 = vmatpush.msra.mxu0 0.0
    %142 = vmatpush.msra.mxu0 0.0
    %143 = vmatpush.msra.mxu0 0.0
    %144 = vmatpush.msra.mxu0 0.0
    %145 = vmatpush.msra.mxu0 0.0
    %146 = vmatpush.msra.mxu0 0.0
    %147 = vmatpush.msra.mxu0 0.0
    %148 = vmatpush.msra.mxu0 0.0
    %149 = vmatpush.msra.mxu0 0.0
    %150 = vmatpush.msra.mxu0 0.0
    %151 = vmatpush.msra.mxu0 0.0
    %152 = vmatpush.msra.mxu0 0.0
    %153 = vmatpush.msra.mxu0 %v109
    %154 = vmatpush.msra.mxu0 %v108
    %155 = vmatpush.msra.mxu0 %v107
    %156 = vmatmul.f32.gmra.mxu0 %v138
    %v157 = vpop.f32.mrf.mxu0
    %v158 = vadd.f32 %v134, %v157
    %159 = vdwg.mxu0
    %v160 = vld [vmem:[%s4] sm:$0x1]
    %v162 = vperm.slane %v160, 0
    %v164 = vadd.f32 %v158, %v162
    %v165 = vmax.f32 %v164, 0.0
    %v166 = vld [vmem:[#allocation10] sm:$0xff]
    %v167 = vld [vmem:[#allocation10 + $0x8] sm:$0xff]
    %v168 = vld [vmem:[#allocation10 + $0x10] sm:$0xff]
    %v169 = vld [vmem:[#allocation10 + $0x18] sm:$0xff]
    %v170 = vld [vmem:[%s6] sm:$0x1]
    %v172 = vperm.slane %v170, 0
    %vm174 = vcmask 261120
    %v176 = vsel %vm174, %v165, 0
    %178 = vmatpush.msra.mxu0 0.0
    %179 = vmatpush.msra.mxu0 0.0
    %180 = vmatpush.msra.mxu0 0.0
    %181 = vmatpush.msra.mxu0 0.0
    %182 = vmatpush.msra.mxu0 0.0
    %183 = vmatpush.msra.mxu0 0.0
    %184 = vmatpush.msra.mxu0 0.0
    %185 = vmatpush.msra.mxu0 0.0
    %186 = vmatpush.msra.mxu0 0.0
    %187 = vmatpush.msra.mxu0 0.0
    %188 = vmatpush.msra.mxu0 0.0
    %189 = vmatpush.msra.mxu0 0.0
    %190 = vmatpush.msra.mxu0 %v169
    %191 = vmatpush.msra.mxu0 %v168
    %192 = vmatpush.msra.mxu0 %v167
    %193 = vmatpush.msra.mxu0 %v166
    %194 = vmatmul.f32.gmra.mxu0 %v176
    %v195 = vpop.f32.mrf.mxu0
    %v196 = vadd.f32 %v172, %v195
    %197 = vdwg.mxu0
    %v198 = vmax.f32 %v196, 0.0
    %v199 = vld [vmem:[%s7] sm:$0x1]
    %v201 = vperm.slane %v199, 0
    %v203 = vmul.f32 %v198, %v201
    %v204 = vsel %vm174, %v203, 0.0
    %205 = vadd.xlane.f32.xlu0 %v204
    %v206 = vpop.xlane.xlu0 %205
    %v207 = vld [vmem:[#allocation2] sm:$0x1]
    %v209 = vperm.slane %v207, 0
    %v211 = vadd.f32 %v206, %v209
    %vm212 = vcmask 7168
    %213 = vst.msk [vmem:[%s9] sm:$0xff] %vm212, %v211
    // Predicated region
    $region58: #{tpu_custom_call.1} parent=1 // pred_check
      _
    $region59: #{tpu_custom_call.1} parent=1 // pred_check_branch
      %215 = sbr.rel (0) target = $region61
    $region60: #{tpu_custom_call.1} parent=1 // pred_region
      _
    $region61: #{tpu_custom_call.1} parent=1 // pred_fallthru
      _
    // Predicated region
    $region62: #{tpu_custom_call.1} parent=1 // pred_check
      _
    $region63: #{tpu_custom_call.1} parent=1 // pred_check_branch
      %217 = sbr.rel (0) target = $region65
    $region64: #{tpu_custom_call.1} parent=1 // pred_region
      _
    $region65: #{tpu_custom_call.1} parent=1 // pred_fallthru
      _
    %218 = vsyncpa [#allocation4], 1
    %219 = vsyncpa [#allocation6], 1
    %220 = vsyncpa [#allocation9], 1

</llo_original>
